<compile_context>
chip_gen: v5e
topology: v5e:2x2
jax: 0.10.0
libtpu: 0.0.40
codegen_flags: <defaults>
</compile_context>

<pallas_src>
import functools

import jax
import jax.numpy as jnp
from jax.experimental import pallas as pl
from jax.experimental.pallas import tpu as pltpu


def _spatial_attn_kernel(x_ref, w_ref, b_ref, o_ref, *, num_channels, hw):
    # x_ref : (TB, C*HWp) f32    per-batch-tile input, channels laid out along lanes
    # w_ref : (2*HWp, HWp) bf16  stacked [Toeplitz_avg * (1/C) ; Toeplitz_max], VMEM-resident
    # b_ref : (1, 1) f32         conv bias (SMEM scalar)
    # o_ref : (TB, HWp) f32      sigmoid(conv) output, lane-dense
    s = x_ref[:, pl.ds(0, hw)]
    m = s
    for c in range(1, num_channels):            # static unroll over channels (VPU, f32)
        xc = x_ref[:, pl.ds(c * hw, hw)]
        s = s + xc
        m = jnp.maximum(m, xc)

    # 1/C is folded into the avg Toeplitz block, so the plain channel-sum `s`
    # is the LHS. One stacked bf16 MXU matmul (K = 2*HWp), f32 accumulate.
    lhs = jnp.concatenate([s, m], axis=1).astype(jnp.bfloat16)       # (TB, 2*HWp)
    acc = jnp.dot(lhs, w_ref[...], preferred_element_type=jnp.float32)
    z = acc + b_ref[0, 0]

    # sigmoid = 1 / (1 + exp(-z)): exp and reciprocal both on the EUP slot.
    o_ref[...] = pl.reciprocal(1.0 + jnp.exp(-z), approx=True)


def _conv_to_toeplitz(w_c, H, W, HWp):
    """(7,7) conv kernel for one input channel -> (HWp, HWp) matrix M such that
    x_flat_padded @ M == conv2d(x, w_c, stride=1, padding=3) flattened
    (zero 'same' padding, PyTorch cross-correlation convention)."""
    HW = H * W
    hi = jnp.arange(H)[:, None, None, None]
    wi = jnp.arange(W)[None, :, None, None]
    ho = jnp.arange(H)[None, None, :, None]
    wo = jnp.arange(W)[None, None, None, :]
    ky = hi - ho + 3
    kx = wi - wo + 3
    valid = (ky >= 0) & (ky < 7) & (kx >= 0) & (kx < 7)
    vals = w_c.astype(jnp.float32)[jnp.clip(ky, 0, 6), jnp.clip(kx, 0, 6)]
    mat = jnp.where(valid, vals, 0.0).reshape(HW, HW)
    if HWp != HW:
        mat = jnp.pad(mat, ((0, HWp - HW), (0, HWp - HW)))
    return mat


def spatial_attention_forward(x, params):
    """x: (N, C, H, W) float32; params: {'w': (1,2,7,7), 'b': (1,)} conv weights."""
    N, C, H, W = x.shape
    HW = H * W
    HWp = ((HW + 127) // 128) * 128          # lane-dense (multiple-of-128) spatial width

    # Flatten spatial into lanes (contiguous reshape, free); pad lanes only if
    # H*W is not 128-aligned. No batch padding (ragged last block instead).
    x_sp = x.reshape(N, C, HW)
    if HWp != HW:
        x_sp = jnp.pad(x_sp, ((0, 0), (0, 0), (0, HWp - HW)))
    x_flat = x_sp.reshape(N, C * HWp)

    # Fold the 7x7 conv into one stacked (2*HWp, HWp) bf16 matrix at weight-load
    # time. Channel 0 of cat([avg, max]) is avg -> fold the 1/C mean scale in.
    w, b = params["w"], params["b"]
    m_avg = _conv_to_toeplitz(w[0, 0], H, W, HWp) * (1.0 / C)
    m_max = _conv_to_toeplitz(w[0, 1], H, W, HWp)
    w_stack = jnp.concatenate([m_avg, m_max], axis=0).astype(jnp.bfloat16)
    b_smem = b.reshape(1, 1).astype(jnp.float32)

    # Biggest batch tile the batch allows (up to 128 rows) -> fills MXU rows and
    # amortizes per-grid-step pipeline overhead; ragged last block is fine.
    tb = N if N <= 128 else 128
    grid = (pl.cdiv(N, tb),)

    # VMEM budget: single-buffered weights + double-buffered x / out blocks.
    vmem_bytes = (2 * HWp * HWp * 2          # bf16 stacked Toeplitz (single copy)
                  + 2 * tb * C * HWp * 4     # x block, double-buffered
                  + 2 * tb * HWp * 4)        # out block, double-buffered
    vmem_limit = int(min(max(32 * 1024 * 1024, 2 * vmem_bytes), 96 * 1024 * 1024))

    kernel = functools.partial(_spatial_attn_kernel, num_channels=C, hw=HWp)
    out = pl.pallas_call(
        kernel,
        out_shape=jax.ShapeDtypeStruct((N, HWp), jnp.float32),
        grid=grid,
        in_specs=[
            pl.BlockSpec((tb, C * HWp), lambda i: (i, 0)),
            pl.BlockSpec(memory_space=pltpu.MemorySpace.VMEM),   # grid-constant, single copy
            pl.BlockSpec(memory_space=pltpu.MemorySpace.SMEM),   # bias scalar
        ],
        out_specs=pl.BlockSpec((tb, HWp), lambda i: (i, 0)),
        compiler_params=pltpu.CompilerParams(
            dimension_semantics=("parallel",),
            vmem_limit_bytes=vmem_limit),
    )(x_flat, w_stack, b_smem)

    return out[:, :HW].reshape(N, 1, H, W)


if __name__ == "__main__":
    key = jax.random.PRNGKey(0)
    k_in, k_w, k_b = jax.random.split(key, 3)

    N, C, H, W = 2, 4, 16, 16
    x = jax.random.normal(k_in, (N, C, H, W), dtype=jnp.float32)

    # Conv2d(2, 1, 7, padding=3) default PyTorch init: U(-1/sqrt(fan_in), +1/sqrt(fan_in))
    fan_in = 2 * 7 * 7
    bound = 1.0 / jnp.sqrt(float(fan_in))
    w = jax.random.uniform(k_w, (1, 2, 7, 7), jnp.float32, minval=-bound, maxval=bound)
    b = jax.random.uniform(k_b, (1,), jnp.float32, minval=-bound, maxval=bound)
    params = {"w": w, "b": b}

    out = spatial_attention_forward(x, params)
    out = jax.block_until_ready(out)

    # Reference: plain JAX with a real convolution (same math as PyTorch forward).
    avg = jnp.mean(x, axis=1, keepdims=True)
    mx = jnp.max(x, axis=1, keepdims=True)
    cat = jnp.concatenate([avg, mx], axis=1)
    conv = jax.lax.conv_general_dilated(
        cat, w, window_strides=(1, 1), padding=((3, 3), (3, 3)),
        dimension_numbers=("NCHW", "OIHW", "NCHW"))
    ref = 1.0 / (1.0 + jnp.exp(-(conv + b.reshape(1, 1, 1, 1))))

    assert out.shape == (N, 1, H, W)
    # bf16 matmul operands (f32 accumulate) -> relaxed tolerance vs f32 reference.
    assert jnp.allclose(out, ref, atol=2e-2, rtol=2e-2), float(jnp.max(jnp.abs(out - ref)))

    print("KERNEL_OK")
</pallas_src>

<mosaic_0001>
module attributes {stable_mosaic.version = 11 : i64} {
  func.func @_spatial_attn_kernel(%arg0: i32, %arg1: memref<2x1024xf32, #tpu.memory_space<vmem>>, %arg2: memref<512x256xbf16, #tpu.memory_space<vmem>>, %arg3: memref<1x1xf32, #tpu.memory_space<smem>>, %arg4: memref<2x256xf32, #tpu.memory_space<vmem>>) attributes {dimension_semantics = [#tpu.dimension_semantics<parallel>], iteration_bounds = array<i64: 1>, scalar_prefetch = 0 : i64, scratch_operands = 0 : i64, tpu.core_type = #tpu.core_type<tc>, window_params = [{transform_indices = @transform_0, window_bounds = array<i64: 2, 1024>}, {pipeline_mode = #tpu.pipeline_mode<synchronous>, transform_indices = @transform_1, window_bounds = array<i64: 512, 256>}, {transform_indices = @transform_2, window_bounds = array<i64: 1, 1>}, {transform_indices = @transform_3, window_bounds = array<i64: 2, 256>}]} {
    %c0 = arith.constant 0 : index
    %c0_0 = arith.constant 0 : index
    %0 = vector.load %arg1[%c0, %c0_0] : memref<2x1024xf32, #tpu.memory_space<vmem>>, vector<2x256xf32>
    %c0_1 = arith.constant 0 : index
    %c256 = arith.constant 256 : index
    %1 = vector.load %arg1[%c0_1, %c256] : memref<2x1024xf32, #tpu.memory_space<vmem>>, vector<2x256xf32>
    %2 = arith.addf %0, %1 : vector<2x256xf32>
    %3 = arith.maximumf %0, %1 : vector<2x256xf32>
    %c0_2 = arith.constant 0 : index
    %c512 = arith.constant 512 : index
    %4 = vector.load %arg1[%c0_2, %c512] : memref<2x1024xf32, #tpu.memory_space<vmem>>, vector<2x256xf32>
    %5 = arith.addf %2, %4 : vector<2x256xf32>
    %6 = arith.maximumf %3, %4 : vector<2x256xf32>
    %c0_3 = arith.constant 0 : index
    %c768 = arith.constant 768 : index
    %7 = vector.load %arg1[%c0_3, %c768] : memref<2x1024xf32, #tpu.memory_space<vmem>>, vector<2x256xf32>
    %8 = arith.addf %5, %7 : vector<2x256xf32>
    %9 = arith.maximumf %6, %7 : vector<2x256xf32>
    %10 = tpu.concatenate %8, %9 in 1 : vector<2x256xf32>, vector<2x256xf32> -> vector<2x512xf32>
    %11 = arith.truncf %10 : vector<2x512xf32> to vector<2x512xbf16>
    %c0_4 = arith.constant 0 : index
    %c0_5 = arith.constant 0 : index
    %12 = vector.load %arg2[%c0_4, %c0_5] : memref<512x256xbf16, #tpu.memory_space<vmem>>, vector<512x256xbf16>
    %cst = arith.constant dense<0.000000e+00> : vector<2x256xf32>
    %13 = tpu.matmul %11, %12, %cst {dimension_numbers = #tpu.dot_dimension_numbers<[1], [0], [0], [1], [0, 0, 1, 1], [], []>} : vector<2x512xbf16>, vector<512x256xbf16>, vector<2x256xf32> -> vector<2x256xf32>
    %c0_6 = arith.constant 0 : index
    %c0_7 = arith.constant 0 : index
    %14 = memref.load %arg3[%c0_6, %c0_7] : memref<1x1xf32, #tpu.memory_space<smem>>
    %15 = vector.broadcast %14 : f32 to vector<2x256xf32>
    %16 = arith.addf %13, %15 : vector<2x256xf32>
    %cst_8 = arith.constant 0.000000e+00 : f32
    %17 = vector.broadcast %cst_8 : f32 to vector<2x256xf32>
    %18 = arith.subf %17, %16 : vector<2x256xf32>
    %19 = math.exp %18 : vector<2x256xf32>
    %cst_9 = arith.constant 1.000000e+00 : f32
    %20 = vector.broadcast %cst_9 : f32 to vector<2x256xf32>
    %21 = arith.addf %20, %19 : vector<2x256xf32>
    %22 = tpu.reciprocal %21 {approx = true} : vector<2x256xf32> -> vector<2x256xf32>
    %c0_10 = arith.constant 0 : index
    %c0_11 = arith.constant 0 : index
    %23 = vector.load %arg4[%c0_10, %c0_11] : memref<2x256xf32, #tpu.memory_space<vmem>>, vector<2x256xf32>
    tpu.vector_store %arg4[%c0_10, %c0_11], %22 {strides = array<i32>} : memref<2x256xf32, #tpu.memory_space<vmem>>, vector<2x256xf32>,
    return
  }
  func.func @transform_0(%arg0: i32) -> (i32, i32) {
    %c0_i32 = arith.constant 0 : i32
    %c0_i32_0 = arith.constant 0 : i32
    return %arg0, %c0_i32 : i32, i32
  }
  func.func @transform_1(%arg0: i32) -> (i32, i32) {
    %c0_i32 = arith.constant 0 : i32
    %c0_i32_0 = arith.constant 0 : i32
    %c0_i32_1 = arith.constant 0 : i32
    return %c0_i32, %c0_i32_0 : i32, i32
  }
  func.func @transform_2(%arg0: i32) -> (i32, i32) {
    %c0_i32 = arith.constant 0 : i32
    %c0_i32_0 = arith.constant 0 : i32
    %c0_i32_1 = arith.constant 0 : i32
    return %c0_i32, %c0_i32_0 : i32, i32
  }
  func.func @transform_3(%arg0: i32) -> (i32, i32) {
    %c0_i32 = arith.constant 0 : i32
    %c0_i32_0 = arith.constant 0 : i32
    return %arg0, %c0_i32 : i32, i32
  }
}

</mosaic_0001>

<llo_original>
// kernel: tpu_custom_call.1
$region0: #{tpu_custom_call.1}
  #allocation0 [shape = 'u32[]', space=smem, size = 0x4, offset = 0x4, fixed_abs, tag = 'smem constant byte address 0x4 - core index']
  #allocation1 [shape = 'u32[72,128]{1,0:T(1,128)}', space=vmem, size = 0x9000, scoped, tag = 'internal scratch']
  #allocation2 [shape = 'f32[1,1]{1,0:T(1,128)S(6)}', space=smem, size = 0x200, scoped, tag = 'scoped memory for tpu_custom_call.1']
  %s0 = inlined_call_operand.hbm [shape: f32[2,1024], index: 0, kind: input, shape index: {}]
  %s1 = inlined_call_operand.hbm [shape: bf16[512,256], index: 1, kind: input, shape index: {}]
  %s2 = inlined_call_operand.<no memory space> [shape: f32[1,1], index: 2, kind: input, shape index: {}]
  %s3 = inlined_call_operand.hbm [shape: f32[2,256], index: 3, kind: output, shape index: {}]
  %s4 = sld [smem:[#allocation0]]
  $region30: #{tpu_custom_call.1} parent=0
    _
  %s6 = ssub.s32 1, %s4
  %s7 = scalar_select 0, %s6, %s4
  %8 = sst [smem:[#allocation2]] %s2
  $region1: #{tpu_custom_call.1} parent=0
    #allocation3 [shape = 'u8[8192]{0}', space=vmem, size = 0x2000, scoped, tag = 'input window, operand 0, single buffered']
    #allocation4 [shape = 's32[1]{0}', space=sflag, size = 0x4, scoped, tag = 'scoped memory for tpu_custom_call.1']
    #allocation5 [shape = 's32[1]{0}', space=sflag, size = 0x4, scoped, tag = 'scoped memory for tpu_custom_call.1']
    #allocation6 [shape = 'u8[262144]{0}', space=vmem, size = 0x40000, scoped, tag = 'input window, operand 1, single buffered']
    #allocation7 [shape = 's32[1]{0}', space=sflag, size = 0x4, scoped, tag = 'scoped memory for tpu_custom_call.1']
    #allocation8 [shape = 'u8[2048]{0}', space=vmem, size = 0x800, scoped, tag = 'output window, operand 0, single buffered']
    %9 = vsyncpa [#allocation4], 0
    %10 = vsyncpa [#allocation7], 0
    %11 = vsyncpa [#allocation5], 0
    // Predicated region
    $region2: #{tpu_custom_call.1} parent=1 // pred_check
      _
    $region3: #{tpu_custom_call.1} parent=1 // pred_check_branch
      %13 = sbr.rel (0) target = $region5
    $region4: #{tpu_custom_call.1} parent=1 // pred_region
      %15 = vsyncadd [#allocation4], 0
      %s17 = sshll.u32 %s0, 4
      %s18 = int_to_ptr.hbm [resolvable:$true] %s17
      %s19 = sshll.u32 [#allocation3], 4
      %s20 = int_to_ptr.vmem [resolvable:$true] %s19
      %22 = dma.hbm_to_vmem [thread:$0]  %s18, 256, %s20, [#allocation4]
    $region5: #{tpu_custom_call.1} parent=1 // pred_fallthru
      _
    // Predicated region
    $region6: #{tpu_custom_call.1} parent=1 // pred_check
      _
    $region7: #{tpu_custom_call.1} parent=1 // pred_check_branch
      %24 = sbr.rel (0) target = $region9
    $region8: #{tpu_custom_call.1} parent=1 // pred_region
      %26 = vsyncadd [#allocation7], 0
      %s27 = sshll.u32 %s1, 4
      %s28 = int_to_ptr.hbm [resolvable:$true] %s27
      %s29 = sshll.u32 [#allocation6], 4
      %s30 = int_to_ptr.vmem [resolvable:$true] %s29
      %35 = dma.hbm_to_vmem [thread:$0]  %s28, 8192, %s30, [#allocation7], 128, 128, 8
    $region9: #{tpu_custom_call.1} parent=1 // pred_fallthru
      _
    // Predicated region
    $region10: #{tpu_custom_call.1} parent=1 // pred_check
      _
    $region11: #{tpu_custom_call.1} parent=1 // pred_check_branch
      %37 = sbr.rel (0) target = $region13
    $region12: #{tpu_custom_call.1} parent=1 // pred_region
      _
    $region13: #{tpu_custom_call.1} parent=1 // pred_fallthru
      _
    // Predicated region
    $region14: #{tpu_custom_call.1} parent=1 // pred_check
      _
    $region15: #{tpu_custom_call.1} parent=1 // pred_check_branch
      %39 = sbr.rel (0) target = $region17
    $region16: #{tpu_custom_call.1} parent=1 // pred_region
      %41 = dma.done [#allocation4], 256
    $region17: #{tpu_custom_call.1} parent=1 // pred_fallthru
      _
    // Predicated region
    $region18: #{tpu_custom_call.1} parent=1 // pred_check
      _
    $region19: #{tpu_custom_call.1} parent=1 // pred_check_branch
      %43 = sbr.rel (0) target = $region21
    $region20: #{tpu_custom_call.1} parent=1 // pred_region
      %45 = dma.done [#allocation7], 8192
    $region21: #{tpu_custom_call.1} parent=1 // pred_fallthru
      _
    %v46 = vld [vmem:[#allocation3] sm:$0xf]
    %v47 = vld [vmem:[#allocation3 + $0x4] sm:$0xf]
    %v48 = vadd.f32 %v46, %v47
    %v49 = vmax.f32 %v46, %v47
    %v50 = vld [vmem:[#allocation3 + $0x8] sm:$0xf]
    %v51 = vadd.f32 %v48, %v50
    %v52 = vmax.f32 %v49, %v50
    %v53 = vld [vmem:[#allocation3 + $0xc] sm:$0xf]
    %v54 = vadd.f32 %v51, %v53
    %v55 = vmax.f32 %v52, %v53
    %57 = vst [vmem:[#allocation1] ss:$4 sm:$0xff] %v54
    %v58 = vld.sshfl [vmem:[#allocation1] sm:$0xff pattern:$0x73625140]
    %v59 = vld.sshfl [vmem:[#allocation1 + $0x8] sm:$0xff pattern:$0x73625140]
    %63 = vst [vmem:[#allocation1] ss:$4 sm:$0xff] %v55
    %v64 = vld.sshfl [vmem:[#allocation1] sm:$0xff pattern:$0x73625140]
    %v65 = vld.sshfl [vmem:[#allocation1 + $0x8] sm:$0xff pattern:$0x73625140]
    %v68 = vpack.c.bf16 %v58, %v58
    %v69 = vpack.c.bf16 %v59, %v59
    %v70 = vpack.c.bf16 %v64, %v64
    %v71 = vpack.c.bf16 %v65, %v65
    %v72 = vld [vmem:[#allocation6] sm:$0xff]
    %v73 = vld [vmem:[#allocation6 + $0x8] sm:$0xff]
    %v74 = vld [vmem:[#allocation6 + $0x10] sm:$0xff]
    %v75 = vld [vmem:[#allocation6 + $0x18] sm:$0xff]
    %v76 = vld [vmem:[#allocation6 + $0x20] sm:$0xff]
    %v77 = vld [vmem:[#allocation6 + $0x28] sm:$0xff]
    %v78 = vld [vmem:[#allocation6 + $0x30] sm:$0xff]
    %v79 = vld [vmem:[#allocation6 + $0x38] sm:$0xff]
    %v80 = vld [vmem:[#allocation6 + $0x40] sm:$0xff]
    %v81 = vld [vmem:[#allocation6 + $0x48] sm:$0xff]
    %v82 = vld [vmem:[#allocation6 + $0x50] sm:$0xff]
    %v83 = vld [vmem:[#allocation6 + $0x58] sm:$0xff]
    %v84 = vld [vmem:[#allocation6 + $0x60] sm:$0xff]
    %v85 = vld [vmem:[#allocation6 + $0x68] sm:$0xff]
    %v86 = vld [vmem:[#allocation6 + $0x70] sm:$0xff]
    %v87 = vld [vmem:[#allocation6 + $0x78] sm:$0xff]
    %v88 = vld [vmem:[#allocation6 + $0x80] sm:$0xff]
    %v89 = vld [vmem:[#allocation6 + $0x88] sm:$0xff]
    %v90 = vld [vmem:[#allocation6 + $0x90] sm:$0xff]
    %v91 = vld [vmem:[#allocation6 + $0x98] sm:$0xff]
    %v92 = vld [vmem:[#allocation6 + $0xa0] sm:$0xff]
    %v93 = vld [vmem:[#allocation6 + $0xa8] sm:$0xff]
    %v94 = vld [vmem:[#allocation6 + $0xb0] sm:$0xff]
    %v95 = vld [vmem:[#allocation6 + $0xb8] sm:$0xff]
    %v96 = vld [vmem:[#allocation6 + $0xc0] sm:$0xff]
    %v97 = vld [vmem:[#allocation6 + $0xc8] sm:$0xff]
    %v98 = vld [vmem:[#allocation6 + $0xd0] sm:$0xff]
    %v99 = vld [vmem:[#allocation6 + $0xd8] sm:$0xff]
    %v100 = vld [vmem:[#allocation6 + $0xe0] sm:$0xff]
    %v101 = vld [vmem:[#allocation6 + $0xe8] sm:$0xff]
    %v102 = vld [vmem:[#allocation6 + $0xf0] sm:$0xff]
    %v103 = vld [vmem:[#allocation6 + $0xf8] sm:$0xff]
    %v104 = vld [vmem:[#allocation6 + $0x100] sm:$0xff]
    %v105 = vld [vmem:[#allocation6 + $0x108] sm:$0xff]
    %v106 = vld [vmem:[#allocation6 + $0x110] sm:$0xff]
    %v107 = vld [vmem:[#allocation6 + $0x118] sm:$0xff]
    %v108 = vld [vmem:[#allocation6 + $0x120] sm:$0xff]
    %v109 = vld [vmem:[#allocation6 + $0x128] sm:$0xff]
    %v110 = vld [vmem:[#allocation6 + $0x130] sm:$0xff]
    %v111 = vld [vmem:[#allocation6 + $0x138] sm:$0xff]
    %v112 = vld [vmem:[#allocation6 + $0x140] sm:$0xff]
    %v113 = vld [vmem:[#allocation6 + $0x148] sm:$0xff]
    %v114 = vld [vmem:[#allocation6 + $0x150] sm:$0xff]
    %v115 = vld [vmem:[#allocation6 + $0x158] sm:$0xff]
    %v116 = vld [vmem:[#allocation6 + $0x160] sm:$0xff]
    %v117 = vld [vmem:[#allocation6 + $0x168] sm:$0xff]
    %v118 = vld [vmem:[#allocation6 + $0x170] sm:$0xff]
    %v119 = vld [vmem:[#allocation6 + $0x178] sm:$0xff]
    %v120 = vld [vmem:[#allocation6 + $0x180] sm:$0xff]
    %v121 = vld [vmem:[#allocation6 + $0x188] sm:$0xff]
    %v122 = vld [vmem:[#allocation6 + $0x190] sm:$0xff]
    %v123 = vld [vmem:[#allocation6 + $0x198] sm:$0xff]
    %v124 = vld [vmem:[#allocation6 + $0x1a0] sm:$0xff]
    %v125 = vld [vmem:[#allocation6 + $0x1a8] sm:$0xff]
    %v126 = vld [vmem:[#allocation6 + $0x1b0] sm:$0xff]
    %v127 = vld [vmem:[#allocation6 + $0x1b8] sm:$0xff]
    %v128 = vld [vmem:[#allocation6 + $0x1c0] sm:$0xff]
    %v129 = vld [vmem:[#allocation6 + $0x1c8] sm:$0xff]
    %v130 = vld [vmem:[#allocation6 + $0x1d0] sm:$0xff]
    %v131 = vld [vmem:[#allocation6 + $0x1d8] sm:$0xff]
    %v132 = vld [vmem:[#allocation6 + $0x1e0] sm:$0xff]
    %v133 = vld [vmem:[#allocation6 + $0x1e8] sm:$0xff]
    %v134 = vld [vmem:[#allocation6 + $0x1f0] sm:$0xff]
    %v135 = vld [vmem:[#allocation6 + $0x1f8] sm:$0xff]
    %s136 = sld [smem:[#allocation2]]
    %v137 = vstv %s136
    %v202 = vunpack.c.l.b16 %v72
    %v203 = vunpack.c.h.b16 %v72
    %v204 = vunpack.c.l.b16 %v73
    %v205 = vunpack.c.h.b16 %v73
    %v206 = vunpack.c.l.b16 %v74
    %v207 = vunpack.c.h.b16 %v74
    %v208 = vunpack.c.l.b16 %v75
    %v209 = vunpack.c.h.b16 %v75
    %v210 = vunpack.c.l.b16 %v76
    %v211 = vunpack.c.h.b16 %v76
    %v212 = vunpack.c.l.b16 %v77
    %v213 = vunpack.c.h.b16 %v77
    %v214 = vunpack.c.l.b16 %v78
    %v215 = vunpack.c.h.b16 %v78
    %v216 = vunpack.c.l.b16 %v79
    %v217 = vunpack.c.h.b16 %v79
    %v218 = vunpack.c.l.b16 %v80
    %v219 = vunpack.c.h.b16 %v80
    %v220 = vunpack.c.l.b16 %v81
    %v221 = vunpack.c.h.b16 %v81
    %v222 = vunpack.c.l.b16 %v82
    %v223 = vunpack.c.h.b16 %v82
    %v224 = vunpack.c.l.b16 %v83
    %v225 = vunpack.c.h.b16 %v83
    %v226 = vunpack.c.l.b16 %v84
    %v227 = vunpack.c.h.b16 %v84
    %v228 = vunpack.c.l.b16 %v85
    %v229 = vunpack.c.h.b16 %v85
    %v230 = vunpack.c.l.b16 %v86
    %v231 = vunpack.c.h.b16 %v86
    %v232 = vunpack.c.l.b16 %v87
    %v233 = vunpack.c.h.b16 %v87
    %v234 = vunpack.c.l.b16 %v88
    %v235 = vunpack.c.h.b16 %v88
    %v236 = vunpack.c.l.b16 %v89
    %v237 = vunpack.c.h.b16 %v89
    %v238 = vunpack.c.l.b16 %v90
    %v239 = vunpack.c.h.b16 %v90
    %v240 = vunpack.c.l.b16 %v91
    %v241 = vunpack.c.h.b16 %v91
    %v242 = vunpack.c.l.b16 %v92
    %v243 = vunpack.c.h.b16 %v92
    %v244 = vunpack.c.l.b16 %v93
    %v245 = vunpack.c.h.b16 %v93
    %v246 = vunpack.c.l.b16 %v94
    %v247 = vunpack.c.h.b16 %v94
    %v248 = vunpack.c.l.b16 %v95
    %v249 = vunpack.c.h.b16 %v95
    %v250 = vunpack.c.l.b16 %v96
    %v251 = vunpack.c.h.b16 %v96
    %v252 = vunpack.c.l.b16 %v97
    %v253 = vunpack.c.h.b16 %v97
    %v254 = vunpack.c.l.b16 %v98
    %v255 = vunpack.c.h.b16 %v98
    %v256 = vunpack.c.l.b16 %v99
    %v257 = vunpack.c.h.b16 %v99
    %v258 = vunpack.c.l.b16 %v100
    %v259 = vunpack.c.h.b16 %v100
    %v260 = vunpack.c.l.b16 %v101
    %v261 = vunpack.c.h.b16 %v101
    %v262 = vunpack.c.l.b16 %v102
    %v263 = vunpack.c.h.b16 %v102
    %v264 = vunpack.c.l.b16 %v103
    %v265 = vunpack.c.h.b16 %v103
    %v266 = vunpack.c.l.b16 %v104
    %v267 = vunpack.c.h.b16 %v104
    %v268 = vunpack.c.l.b16 %v105
    %v269 = vunpack.c.h.b16 %v105
    %v270 = vunpack.c.l.b16 %v106
    %v271 = vunpack.c.h.b16 %v106
    %v272 = vunpack.c.l.b16 %v107
    %v273 = vunpack.c.h.b16 %v107
    %v274 = vunpack.c.l.b16 %v108
    %v275 = vunpack.c.h.b16 %v108
    %v276 = vunpack.c.l.b16 %v109
    %v277 = vunpack.c.h.b16 %v109
    %v278 = vunpack.c.l.b16 %v110
    %v279 = vunpack.c.h.b16 %v110
    %v280 = vunpack.c.l.b16 %v111
    %v281 = vunpack.c.h.b16 %v111
    %v282 = vunpack.c.l.b16 %v112
    %v283 = vunpack.c.h.b16 %v112
    %v284 = vunpack.c.l.b16 %v113
    %v285 = vunpack.c.h.b16 %v113
    %v286 = vunpack.c.l.b16 %v114
    %v287 = vunpack.c.h.b16 %v114
    %v288 = vunpack.c.l.b16 %v115
    %v289 = vunpack.c.h.b16 %v115
    %v290 = vunpack.c.l.b16 %v116
    %v291 = vunpack.c.h.b16 %v116
    %v292 = vunpack.c.l.b16 %v117
    %v293 = vunpack.c.h.b16 %v117
    %v294 = vunpack.c.l.b16 %v118
    %v295 = vunpack.c.h.b16 %v118
    %v296 = vunpack.c.l.b16 %v119
    %v297 = vunpack.c.h.b16 %v119
    %v298 = vunpack.c.l.b16 %v120
    %v299 = vunpack.c.h.b16 %v120
    %v300 = vunpack.c.l.b16 %v121
    %v301 = vunpack.c.h.b16 %v121
    %v302 = vunpack.c.l.b16 %v122
    %v303 = vunpack.c.h.b16 %v122
    %v304 = vunpack.c.l.b16 %v123
    %v305 = vunpack.c.h.b16 %v123
    %v306 = vunpack.c.l.b16 %v124
    %v307 = vunpack.c.h.b16 %v124
    %v308 = vunpack.c.l.b16 %v125
    %v309 = vunpack.c.h.b16 %v125
    %v310 = vunpack.c.l.b16 %v126
    %v311 = vunpack.c.h.b16 %v126
    %v312 = vunpack.c.l.b16 %v127
    %v313 = vunpack.c.h.b16 %v127
    %v314 = vunpack.c.l.b16 %v128
    %v315 = vunpack.c.h.b16 %v128
    %v316 = vunpack.c.l.b16 %v129
    %v317 = vunpack.c.h.b16 %v129
    %v318 = vunpack.c.l.b16 %v130
    %v319 = vunpack.c.h.b16 %v130
    %v320 = vunpack.c.l.b16 %v131
    %v321 = vunpack.c.h.b16 %v131
    %v322 = vunpack.c.l.b16 %v132
    %v323 = vunpack.c.h.b16 %v132
    %v324 = vunpack.c.l.b16 %v133
    %v325 = vunpack.c.h.b16 %v133
    %v326 = vunpack.c.l.b16 %v134
    %v327 = vunpack.c.h.b16 %v134
    %v328 = vunpack.c.l.b16 %v135
    %v329 = vunpack.c.h.b16 %v135
    %v330 = vpack.c.b16 %v204, %v202
    %v331 = vpack.c.b16 %v205, %v203
    %v332 = vpack.c.b16 %v208, %v206
    %v333 = vpack.c.b16 %v209, %v207
    %v334 = vpack.c.b16 %v212, %v210
    %v335 = vpack.c.b16 %v213, %v211
    %v336 = vpack.c.b16 %v216, %v214
    %v337 = vpack.c.b16 %v217, %v215
    %v338 = vpack.c.b16 %v220, %v218
    %v339 = vpack.c.b16 %v221, %v219
    %v340 = vpack.c.b16 %v224, %v222
    %v341 = vpack.c.b16 %v225, %v223
    %v342 = vpack.c.b16 %v228, %v226
    %v343 = vpack.c.b16 %v229, %v227
    %v344 = vpack.c.b16 %v232, %v230
    %v345 = vpack.c.b16 %v233, %v231
    %v346 = vpack.c.b16 %v236, %v234
    %v347 = vpack.c.b16 %v237, %v235
    %v348 = vpack.c.b16 %v240, %v238
    %v349 = vpack.c.b16 %v241, %v239
    %v350 = vpack.c.b16 %v244, %v242
    %v351 = vpack.c.b16 %v245, %v243
    %v352 = vpack.c.b16 %v248, %v246
    %v353 = vpack.c.b16 %v249, %v247
    %v354 = vpack.c.b16 %v252, %v250
    %v355 = vpack.c.b16 %v253, %v251
    %v356 = vpack.c.b16 %v256, %v254
    %v357 = vpack.c.b16 %v257, %v255
    %v358 = vpack.c.b16 %v260, %v258
    %v359 = vpack.c.b16 %v261, %v259
    %v360 = vpack.c.b16 %v264, %v262
    %v361 = vpack.c.b16 %v265, %v263
    %v362 = vpack.c.b16 %v268, %v266
    %v363 = vpack.c.b16 %v269, %v267
    %v364 = vpack.c.b16 %v272, %v270
    %v365 = vpack.c.b16 %v273, %v271
    %v366 = vpack.c.b16 %v276, %v274
    %v367 = vpack.c.b16 %v277, %v275
    %v368 = vpack.c.b16 %v280, %v278
    %v369 = vpack.c.b16 %v281, %v279
    %v370 = vpack.c.b16 %v284, %v282
    %v371 = vpack.c.b16 %v285, %v283
    %v372 = vpack.c.b16 %v288, %v286
    %v373 = vpack.c.b16 %v289, %v287
    %v374 = vpack.c.b16 %v292, %v290
    %v375 = vpack.c.b16 %v293, %v291
    %v376 = vpack.c.b16 %v296, %v294
    %v377 = vpack.c.b16 %v297, %v295
    %v378 = vpack.c.b16 %v300, %v298
    %v379 = vpack.c.b16 %v301, %v299
    %v380 = vpack.c.b16 %v304, %v302
    %v381 = vpack.c.b16 %v305, %v303
    %v382 = vpack.c.b16 %v308, %v306
    %v383 = vpack.c.b16 %v309, %v307
    %v384 = vpack.c.b16 %v312, %v310
    %v385 = vpack.c.b16 %v313, %v311
    %v386 = vpack.c.b16 %v316, %v314
    %v387 = vpack.c.b16 %v317, %v315
    %v388 = vpack.c.b16 %v320, %v318
    %v389 = vpack.c.b16 %v321, %v319
    %v390 = vpack.c.b16 %v324, %v322
    %v391 = vpack.c.b16 %v325, %v323
    %v392 = vpack.c.b16 %v328, %v326
    %v393 = vpack.c.b16 %v329, %v327
    %458 = vmatpush.bf16.msra.mxu0 %v344
    %459 = vmatpush.bf16.msra.mxu0 %v342
    %460 = vmatpush.bf16.msra.mxu0 %v340
    %461 = vmatpush.bf16.msra.mxu0 %v338
    %462 = vmatpush.bf16.msra.mxu0 %v336
    %463 = vmatpush.bf16.msra.mxu0 %v334
    %464 = vmatpush.bf16.msra.mxu0 %v332
    %465 = vmatpush.bf16.msra.mxu0 %v330
    %466 = vmatmul.bf16.gmra.mxu0 %v68
    %v467 = vpop.f32.mrf.mxu0
    %v468 = vadd.f32 %v137, %v467
    %v469 = vpop.f32.mrf.mxu0
    %470 = vdwg.mxu0
    %471 = vmatpush.bf16.msra.mxu0 %v360
    %472 = vmatpush.bf16.msra.mxu0 %v358
    %473 = vmatpush.bf16.msra.mxu0 %v356
    %474 = vmatpush.bf16.msra.mxu0 %v354
    %475 = vmatpush.bf16.msra.mxu0 %v352
    %476 = vmatpush.bf16.msra.mxu0 %v350
    %477 = vmatpush.bf16.msra.mxu0 %v348
    %478 = vmatpush.bf16.msra.mxu0 %v346
    %479 = vmatmul.bf16.gmra.mxu0 %v69
    %v480 = vpop.f32.mrf.mxu0
    %v481 = vadd.f32 %v468, %v480
    %v482 = vpop.f32.mrf.mxu0
    %483 = vdwg.mxu0
    %484 = vmatpush.bf16.msra.mxu0 %v376
    %485 = vmatpush.bf16.msra.mxu0 %v374
    %486 = vmatpush.bf16.msra.mxu0 %v372
    %487 = vmatpush.bf16.msra.mxu0 %v370
    %488 = vmatpush.bf16.msra.mxu0 %v368
    %489 = vmatpush.bf16.msra.mxu0 %v366
    %490 = vmatpush.bf16.msra.mxu0 %v364
    %491 = vmatpush.bf16.msra.mxu0 %v362
    %492 = vmatmul.bf16.gmra.mxu0 %v70
    %v493 = vpop.f32.mrf.mxu0
    %v494 = vadd.f32 %v481, %v493
    %v495 = vpop.f32.mrf.mxu0
    %496 = vdwg.mxu0
    %497 = vmatpush.bf16.msra.mxu0 %v392
    %498 = vmatpush.bf16.msra.mxu0 %v390
    %499 = vmatpush.bf16.msra.mxu0 %v388
    %500 = vmatpush.bf16.msra.mxu0 %v386
    %501 = vmatpush.bf16.msra.mxu0 %v384
    %502 = vmatpush.bf16.msra.mxu0 %v382
    %503 = vmatpush.bf16.msra.mxu0 %v380
    %504 = vmatpush.bf16.msra.mxu0 %v378
    %505 = vmatmul.bf16.gmra.mxu0 %v71
    %v506 = vpop.f32.mrf.mxu0
    %v507 = vadd.f32 %v494, %v506
    %v508 = vpop.f32.mrf.mxu0
    %509 = vdwg.mxu0
    %510 = vmatpush.bf16.msra.mxu0 %v345
    %511 = vmatpush.bf16.msra.mxu0 %v343
    %512 = vmatpush.bf16.msra.mxu0 %v341
    %513 = vmatpush.bf16.msra.mxu0 %v339
    %514 = vmatpush.bf16.msra.mxu0 %v337
    %515 = vmatpush.bf16.msra.mxu0 %v335
    %516 = vmatpush.bf16.msra.mxu0 %v333
    %517 = vmatpush.bf16.msra.mxu0 %v331
    %518 = vmatmul.bf16.gmra.mxu0 %v68
    %v519 = vpop.f32.mrf.mxu0
    %v520 = vadd.f32 %v137, %v519
    %v521 = vpop.f32.mrf.mxu0
    %522 = vdwg.mxu0
    %523 = vmatpush.bf16.msra.mxu0 %v361
    %524 = vmatpush.bf16.msra.mxu0 %v359
    %525 = vmatpush.bf16.msra.mxu0 %v357
    %526 = vmatpush.bf16.msra.mxu0 %v355
    %527 = vmatpush.bf16.msra.mxu0 %v353
    %528 = vmatpush.bf16.msra.mxu0 %v351
    %529 = vmatpush.bf16.msra.mxu0 %v349
    %530 = vmatpush.bf16.msra.mxu0 %v347
    %531 = vmatmul.bf16.gmra.mxu0 %v69
    %v532 = vpop.f32.mrf.mxu0
    %v533 = vadd.f32 %v520, %v532
    %v534 = vpop.f32.mrf.mxu0
    %535 = vdwg.mxu0
    %536 = vmatpush.bf16.msra.mxu0 %v377
    %537 = vmatpush.bf16.msra.mxu0 %v375
    %538 = vmatpush.bf16.msra.mxu0 %v373
    %539 = vmatpush.bf16.msra.mxu0 %v371
    %540 = vmatpush.bf16.msra.mxu0 %v369
    %541 = vmatpush.bf16.msra.mxu0 %v367
    %542 = vmatpush.bf16.msra.mxu0 %v365
    %543 = vmatpush.bf16.msra.mxu0 %v363
    %544 = vmatmul.bf16.gmra.mxu0 %v70
    %v545 = vpop.f32.mrf.mxu0
    %v546 = vadd.f32 %v533, %v545
    %v547 = vpop.f32.mrf.mxu0
    %548 = vdwg.mxu0
    %549 = vmatpush.bf16.msra.mxu0 %v393
    %550 = vmatpush.bf16.msra.mxu0 %v391
    %551 = vmatpush.bf16.msra.mxu0 %v389
    %552 = vmatpush.bf16.msra.mxu0 %v387
    %553 = vmatpush.bf16.msra.mxu0 %v385
    %554 = vmatpush.bf16.msra.mxu0 %v383
    %555 = vmatpush.bf16.msra.mxu0 %v381
    %556 = vmatpush.bf16.msra.mxu0 %v379
    %557 = vmatmul.bf16.gmra.mxu0 %v71
    %v558 = vpop.f32.mrf.mxu0
    %v559 = vadd.f32 %v546, %v558
    %v560 = vpop.f32.mrf.mxu0
    %561 = vdwg.mxu0
    %v562 = vsub.f32 0.0, %v507
    %v563 = vsub.f32 0.0, %v559
    %v564 = vmul.f32 %v562, 1.442695
    %v565 = vpow.pop %v564
    %v566 = vmul.f32 %v563, 1.442695
    %v567 = vpow.pop %v566
    %v568 = vadd.f32 %v565, 1.0
    %v569 = vadd.f32 %v567, 1.0
    %v570 = vrcp.pop %v568
    %v571 = vrcp.pop %v569
    %v574 = vrot.slane %v571, 6
    %vm575 = vcmask 1041408
    %v576 = vsel %vm575, %v570, %v574
    %578 = vst [vmem:[#allocation8] sm:$0xf] %v576
    // Predicated region
    $region22: #{tpu_custom_call.1} parent=1 // pred_check
      _
    $region23: #{tpu_custom_call.1} parent=1 // pred_check_branch
      %580 = sbr.rel (0) target = $region25
    $region24: #{tpu_custom_call.1} parent=1 // pred_region
      %582 = vsyncadd [#allocation5], 0
      %s584 = sshll.u32 [#allocation8], 4
      %s585 = int_to_ptr.vmem [resolvable:$true] %s584
      %s586 = sshll.u32 %s3, 4
      %s587 = int_to_ptr.hbm [resolvable:$true] %s586
      %589 = dma.vmem_to_hbm [thread:$0]  %s585, 64, %s587, [#allocation5]
    $region25: #{tpu_custom_call.1} parent=1 // pred_fallthru
      _
    // Predicated region
    $region26: #{tpu_custom_call.1} parent=1 // pred_check
      _
    $region27: #{tpu_custom_call.1} parent=1 // pred_check_branch
      %591 = sbr.rel (0) target = $region29
    $region28: #{tpu_custom_call.1} parent=1 // pred_region
      %593 = dma.done [#allocation5], 64
    $region29: #{tpu_custom_call.1} parent=1 // pred_fallthru
      _
    %594 = vsyncpa [#allocation4], 1
    %595 = vsyncpa [#allocation7], 1
    %596 = vsyncpa [#allocation5], 1

</llo_original>
